<compile_context>
chip_gen: v5e
topology: v5e:2x2
jax: 0.10.0
libtpu: 0.0.40
codegen_flags: <defaults>
</compile_context>

<pallas_src>
import numpy as np
import jax
import jax.numpy as jnp
from jax import lax
from jax.experimental import pallas as pl
from jax.experimental.pallas import tpu as pltpu

# ----------------------------------------------------------------------------
# Config (mirrors CLIPLossModel(in_size=IN_SIZE, scale_factor=SCALE,
# pool_size=POOL_SIZE) at small, TPU-friendly sizes).
# ----------------------------------------------------------------------------
IN_SIZE = 16                         # input spatial size (H = W)
SCALE = 7                            # nn.Upsample(scale_factor=7), mode='nearest'
POOL_SIZE = 14                       # target "pool_size"
POOL_K = SCALE * IN_SIZE // POOL_SIZE   # AvgPool2d kernel = stride = 8
UP = IN_SIZE * SCALE                 # upsampled spatial = 112
OUT_HW = UP // POOL_K                # pooled spatial = 14

N, C = 2, 4                          # batch, channels
T = 2                                # number of text prompts
D_TXT = 16                           # synthetic text feature dim
EMBED = 32                           # CLIP joint embedding dim
HW = IN_SIZE * IN_SIZE               # 256
OHW = OUT_HW * OUT_HW                # 196 (never enters the kernel)
D_IMG = C * OHW                      # 784  -> original image-projection input dim
D_COMB = C * HW                      # 1024 -> precomposed contraction dim (128-aligned)

LOGIT_SCALE = 100.0                  # CLIP logit_scale (clamped max in OpenAI CLIP)
LOSS_WEIGHT = 1.0                    # CLIPLoss.loss_weight

# Folded epilogue constants:  loss = OUT_BIAS + OUT_SCALE * cos_sim
_OUT_BIAS = float(LOSS_WEIGHT)
_OUT_SCALE = -float(LOGIT_SCALE / 100.0 * LOSS_WEIGHT)


# ----------------------------------------------------------------------------
# Host-side prep (one time, amortized): build the linear operator equivalent to
# Upsample(nearest, x7) followed by AvgPool2d(kernel=8, stride=8), compose it
# with the frozen CLIP image projection, and store it transposed + bf16.
# ----------------------------------------------------------------------------
def build_pool_operator():
    """pooled_flat_per_channel = x_flat_per_channel @ P  with P: (H*W, OH*OW)."""
    P = np.zeros((OUT_HW * OUT_HW, IN_SIZE * IN_SIZE), np.float32)
    inv = 1.0 / float(POOL_K * POOL_K)
    for oh in range(OUT_HW):
        for ow in range(OUT_HW):
            o = oh * OUT_HW + ow
            for di in range(POOL_K):
                for dj in range(POOL_K):
                    i = oh * POOL_K + di
                    j = ow * POOL_K + dj
                    si, sj = i // SCALE, j // SCALE   # nearest-neighbor upsample
                    P[o, si * IN_SIZE + sj] += inv
    return jnp.asarray(P.T)  # (HW, OHW)


def precompose_weights_T(pT, w_img):
    """Return W_combT: (EMBED, D_COMB), lane-dense layout for the kernel.

    W_comb[c*HW + hw, e] = sum_o pT[hw, o] * w_img[c*OHW + o, e], so
    img_emb = image.reshape(N, C*HW) @ W_comb == pooled_flat @ w_img (exact,
    valid because the CLIP encoder weights are frozen).  Stored transposed so
    the contraction operand is 8 dense (8,128)-aligned rows instead of a
    32-wide lane-padded column tile.
    """
    w_img_c = w_img.reshape(C, OHW, EMBED)
    W_comb = jnp.einsum("ho,coe->che", pT, w_img_c)        # (C, HW, EMBED), f32
    return W_comb.reshape(D_COMB, EMBED).T                 # (EMBED, D_COMB)


# ----------------------------------------------------------------------------
# Single fused gridless kernel: (upsample+avgpool+image-projection) matmul,
# text projection, L2-normalize, cosine, StyleCLIP loss.  No HBM intermediates.
# ----------------------------------------------------------------------------
def _clip_loss_fused_kernel(x_ref, wcombT_ref, txt_ref, wtxt_ref, out_ref):
    # bf16 operands, f32 accumulation on the MXU; contraction dim K=1024 is
    # the minor (lane) dim of BOTH operands -> dense, unmasked loads.
    img_emb = lax.dot_general(
        x_ref[...], wcombT_ref[...], (((1,), (1,)), ((), ())),
        preferred_element_type=jnp.float32)                       # (N, EMBED) f32
    txt_emb = jnp.dot(txt_ref[...], wtxt_ref[...],
                      preferred_element_type=jnp.float32)         # (T, EMBED) f32

    # L2-normalize in f32 (rsqrt goes to the EUP slot).
    img_n = img_emb * lax.rsqrt(jnp.sum(img_emb * img_emb, axis=-1, keepdims=True))
    txt_n = txt_emb * lax.rsqrt(jnp.sum(txt_emb * txt_emb, axis=-1, keepdims=True))

    # Cosine logits on the VPU/XLU (broadcast-mul + 32-wide lane reduce) --
    # keeps the tiny (N,E)x(T,E) contraction off the MXU pipeline.
    cos = jnp.sum(img_n[:, None, :] * txt_n[None, :, :], axis=-1)  # (N, T)

    # loss = (1 - logit_scale*cos/100) * loss_weight, constants folded.
    out_ref[...] = _OUT_BIAS + _OUT_SCALE * cos


def clip_loss_forward(image, text_feat, w_combT_bf16, w_txt):
    """CLIPLoss.forward -> third_party_net_loss -> CLIPLossModel.forward."""
    # Contiguous NCHW flatten (free metadata reshape) + bf16 cast for the MXU.
    x2d = image.reshape(N, D_COMB).astype(jnp.bfloat16)

    flops = 2 * N * D_COMB * EMBED + 2 * T * D_TXT * EMBED + 2 * N * T * EMBED
    bytes_accessed = (N * D_COMB * 2 + EMBED * D_COMB * 2        # bf16 operands
                      + T * D_TXT * 4 + D_TXT * EMBED * 4        # f32 text path
                      + N * T * 4)                               # output

    return pl.pallas_call(
        _clip_loss_fused_kernel,
        out_shape=jax.ShapeDtypeStruct((N, T), jnp.float32),
        # Gridless: whole (tiny) operands resident in VMEM, no pipeline
        # prologue/epilogue, no double-buffering of the weight tile.
        in_specs=[
            pl.BlockSpec(memory_space=pltpu.MemorySpace.VMEM),   # x2d (2, 1024) bf16
            pl.BlockSpec(memory_space=pltpu.MemorySpace.VMEM),   # W_combT (32, 1024) bf16
            pl.BlockSpec(memory_space=pltpu.MemorySpace.VMEM),   # text (2, 16) f32
            pl.BlockSpec(memory_space=pltpu.MemorySpace.VMEM),   # w_txt (16, 32) f32
        ],
        out_specs=pl.BlockSpec(memory_space=pltpu.MemorySpace.VMEM),
        cost_estimate=pl.CostEstimate(
            flops=flops, transcendentals=N + T, bytes_accessed=bytes_accessed),
    )(x2d, w_combT_bf16, text_feat, w_txt)


# ----------------------------------------------------------------------------
# Pure-JAX reference for validation (explicit upsample -> avgpool -> project,
# all in f32).
# ----------------------------------------------------------------------------
def reference(image, text_feat, w_img, w_txt):
    up = jnp.repeat(jnp.repeat(image, SCALE, axis=2), SCALE, axis=3)
    pooled = up.reshape(N, C, OUT_HW, POOL_K, OUT_HW, POOL_K).mean(axis=(3, 5))
    img_flat = pooled.reshape(N, -1)
    ie = img_flat @ w_img
    te = text_feat @ w_txt
    ie = ie / jnp.linalg.norm(ie, axis=-1, keepdims=True)
    te = te / jnp.linalg.norm(te, axis=-1, keepdims=True)
    logits = LOGIT_SCALE * ie @ te.T
    return (1.0 - logits / 100.0) * LOSS_WEIGHT


if __name__ == "__main__":
    key = jax.random.PRNGKey(0)
    k_img, k_txt, k_wi, k_wt = jax.random.split(key, 4)

    image = jax.random.normal(k_img, (N, C, IN_SIZE, IN_SIZE), jnp.float32)   # NCHW
    text_feat = jax.random.normal(k_txt, (T, D_TXT), jnp.float32)
    w_img = jax.random.normal(k_wi, (D_IMG, EMBED), jnp.float32) * 0.02
    w_txt = jax.random.normal(k_wt, (D_TXT, EMBED), jnp.float32) * 0.02

    # One-time host prep: pooling operator composed with the frozen projection,
    # transposed to (EMBED, D_COMB) and cast to bf16 for the MXU.
    pT = build_pool_operator()
    w_combT = precompose_weights_T(pT, w_img).astype(jnp.bfloat16)

    out = jax.jit(clip_loss_forward)(image, text_feat, w_combT, w_txt)
    out = jax.block_until_ready(out)

    ref = reference(image, text_feat, w_img, w_txt)
    # bf16 matmul operands (f32 accumulation) -> loosened tolerance vs f32 ref.
    np.testing.assert_allclose(np.asarray(out), np.asarray(ref), rtol=2e-2, atol=2e-2)

    print("KERNEL_OK")
</pallas_src>

<mosaic_0001>
module attributes {stable_mosaic.version = 11 : i64} {
  func.func @_clip_loss_fused_kernel(%arg0: memref<2x1024xbf16, #tpu.memory_space<vmem>>, %arg1: memref<32x1024xbf16, #tpu.memory_space<vmem>>, %arg2: memref<2x16xf32, #tpu.memory_space<vmem>>, %arg3: memref<16x32xf32, #tpu.memory_space<vmem>>, %arg4: memref<2x2xf32, #tpu.memory_space<vmem>>) attributes {dimension_semantics = [], scalar_prefetch = 0 : i64, scratch_operands = 0 : i64, tpu.core_type = #tpu.core_type<tc>} {
    %c0 = arith.constant 0 : index
    %c0_0 = arith.constant 0 : index
    %0 = vector.load %arg0[%c0, %c0_0] : memref<2x1024xbf16, #tpu.memory_space<vmem>>, vector<2x1024xbf16>
    %c0_1 = arith.constant 0 : index
    %c0_2 = arith.constant 0 : index
    %1 = vector.load %arg1[%c0_1, %c0_2] : memref<32x1024xbf16, #tpu.memory_space<vmem>>, vector<32x1024xbf16>
    %cst = arith.constant dense<0.000000e+00> : vector<2x32xf32>
    %2 = tpu.matmul %0, %1, %cst {dimension_numbers = #tpu.dot_dimension_numbers<[1], [1], [0], [0], [0, 0, 1, 0], [], []>} : vector<2x1024xbf16>, vector<32x1024xbf16>, vector<2x32xf32> -> vector<2x32xf32>
    %c0_3 = arith.constant 0 : index
    %c0_4 = arith.constant 0 : index
    %3 = vector.load %arg2[%c0_3, %c0_4] : memref<2x16xf32, #tpu.memory_space<vmem>>, vector<2x16xf32>
    %c0_5 = arith.constant 0 : index
    %c0_6 = arith.constant 0 : index
    %4 = vector.load %arg3[%c0_5, %c0_6] : memref<16x32xf32, #tpu.memory_space<vmem>>, vector<16x32xf32>
    %cst_7 = arith.constant dense<0.000000e+00> : vector<2x32xf32>
    %5 = tpu.matmul %3, %4, %cst_7 {dimension_numbers = #tpu.dot_dimension_numbers<[1], [0], [0], [1], [0, 0, 1, 1], [], []>} : vector<2x16xf32>, vector<16x32xf32>, vector<2x32xf32> -> vector<2x32xf32>
    %6 = arith.mulf %2, %2 : vector<2x32xf32>
    %cst_8 = arith.constant dense<0.000000e+00> : vector<2xf32>
    %7 = vector.multi_reduction <add>, %6, %cst_8 [1] : vector<2x32xf32> to vector<2xf32>
    %8 = vector.shape_cast %7 : vector<2xf32> to vector<2x1xf32>
    %9 = math.rsqrt %8 : vector<2x1xf32>
    %10 = vector.broadcast %9 : vector<2x1xf32> to vector<2x32xf32>
    %11 = arith.mulf %2, %10 : vector<2x32xf32>
    %12 = arith.mulf %5, %5 : vector<2x32xf32>
    %cst_9 = arith.constant dense<0.000000e+00> : vector<2xf32>
    %13 = vector.multi_reduction <add>, %12, %cst_9 [1] : vector<2x32xf32> to vector<2xf32>
    %14 = vector.shape_cast %13 : vector<2xf32> to vector<2x1xf32>
    %15 = math.rsqrt %14 : vector<2x1xf32>
    %16 = vector.broadcast %15 : vector<2x1xf32> to vector<2x32xf32>
    %17 = arith.mulf %5, %16 : vector<2x32xf32>
    %18 = vector.shape_cast %11 : vector<2x32xf32> to vector<2x1x32xf32>
    %19 = vector.shape_cast %17 : vector<2x32xf32> to vector<1x2x32xf32>
    %20 = vector.broadcast %18 : vector<2x1x32xf32> to vector<2x2x32xf32>
    %21 = vector.broadcast %19 : vector<1x2x32xf32> to vector<2x2x32xf32>
    %22 = arith.mulf %20, %21 : vector<2x2x32xf32>
    %cst_10 = arith.constant dense<0.000000e+00> : vector<2x2xf32>
    %23 = vector.multi_reduction <add>, %22, %cst_10 [2] : vector<2x2x32xf32> to vector<2x2xf32>
    %cst_11 = arith.constant -1.000000e+00 : f32
    %24 = vector.broadcast %cst_11 : f32 to vector<2x2xf32>
    %25 = arith.mulf %24, %23 : vector<2x2xf32>
    %cst_12 = arith.constant 1.000000e+00 : f32
    %26 = vector.broadcast %cst_12 : f32 to vector<2x2xf32>
    %27 = arith.addf %26, %25 : vector<2x2xf32>
    %c0_13 = arith.constant 0 : index
    %c0_14 = arith.constant 0 : index
    %28 = vector.load %arg4[%c0_13, %c0_14] : memref<2x2xf32, #tpu.memory_space<vmem>>, vector<2x2xf32>
    tpu.vector_store %arg4[%c0_13, %c0_14], %27 {strides = array<i32>} : memref<2x2xf32, #tpu.memory_space<vmem>>, vector<2x2xf32>,
    return
  }
}

</mosaic_0001>

<llo_original>
// kernel: clip_loss_forward.1
$region0: #{clip_loss_forward.1}
  #allocation0 [shape = 'u32[]', space=smem, size = 0x4, offset = 0x4, fixed_abs, tag = 'smem constant byte address 0x4 - core index']
  #allocation1 [shape = 'u32[72,128]{1,0:T(1,128)}', space=vmem, size = 0x9000, scoped, tag = 'internal scratch']
  %s0 = inlined_call_operand.vmem [shape: bf16[2,1024], index: 0, kind: input, shape index: {}]
  %s1 = inlined_call_operand.vmem [shape: bf16[32,1024], index: 1, kind: input, shape index: {}]
  %s2 = inlined_call_operand.vmem [shape: f32[2,16], index: 2, kind: input, shape index: {}]
  %s3 = inlined_call_operand.vmem [shape: f32[16,32], index: 3, kind: input, shape index: {}]
  %s4 = inlined_call_operand.hbm [shape: f32[2,2], index: 4, kind: output, shape index: {}]
  %s5 = sld [smem:[#allocation0]]
  $region26: #{clip_loss_forward.1} parent=0
    _
  %s7 = ssub.s32 1, %s5
  %s8 = scalar_select 0, %s7, %s5
  $region1: #{clip_loss_forward.1} parent=0
    #allocation2 [shape = 'u8[1024]{0}', space=vmem, size = 0x400, scoped, tag = 'output window, operand 0, single buffered']
    #allocation3 [shape = 's32[1]{0}', space=sflag, size = 0x4, scoped, tag = 'scoped memory for clip_loss_forward.1']
    %9 = vsyncpa [#allocation3], 0
    // Predicated region
    $region2: #{clip_loss_forward.1} parent=1 // pred_check
      _
    $region3: #{clip_loss_forward.1} parent=1 // pred_check_branch
      %11 = sbr.rel (0) target = $region5
    $region4: #{clip_loss_forward.1} parent=1 // pred_region
      _
    $region5: #{clip_loss_forward.1} parent=1 // pred_fallthru
      _
    // Predicated region
    $region6: #{clip_loss_forward.1} parent=1 // pred_check
      _
    $region7: #{clip_loss_forward.1} parent=1 // pred_check_branch
      %13 = sbr.rel (0) target = $region9
    $region8: #{clip_loss_forward.1} parent=1 // pred_region
      _
    $region9: #{clip_loss_forward.1} parent=1 // pred_fallthru
      _
    // Predicated region
    $region10: #{clip_loss_forward.1} parent=1 // pred_check
      _
    $region11: #{clip_loss_forward.1} parent=1 // pred_check_branch
      %15 = sbr.rel (0) target = $region13
    $region12: #{clip_loss_forward.1} parent=1 // pred_region
      _
    $region13: #{clip_loss_forward.1} parent=1 // pred_fallthru
      _
    // Predicated region
    $region14: #{clip_loss_forward.1} parent=1 // pred_check
      _
    $region15: #{clip_loss_forward.1} parent=1 // pred_check_branch
      %17 = sbr.rel (0) target = $region17
    $region16: #{clip_loss_forward.1} parent=1 // pred_region
      _
    $region17: #{clip_loss_forward.1} parent=1 // pred_fallthru
      _
    %v19 = vld [vmem:[%s0] sm:$0xff]
    %v20 = vld [vmem:[%s1] sm:$0xff]
    %v21 = vld [vmem:[%s1 + $0x8] sm:$0xff]
    %v22 = vld [vmem:[%s1 + $0x10] sm:$0xff]
    %v23 = vld [vmem:[%s1 + $0x18] sm:$0xff]
    %v24 = vld [vmem:[%s1 + $0x20] sm:$0xff]
    %v25 = vld [vmem:[%s1 + $0x28] sm:$0xff]
    %v26 = vld [vmem:[%s1 + $0x30] sm:$0xff]
    %v27 = vld [vmem:[%s1 + $0x38] sm:$0xff]
    %v28 = vld [vmem:[%s1 + $0x40] sm:$0xff]
    %v29 = vld [vmem:[%s1 + $0x48] sm:$0xff]
    %v30 = vld [vmem:[%s1 + $0x50] sm:$0xff]
    %v31 = vld [vmem:[%s1 + $0x58] sm:$0xff]
    %v32 = vld [vmem:[%s1 + $0x60] sm:$0xff]
    %v33 = vld [vmem:[%s1 + $0x68] sm:$0xff]
    %v34 = vld [vmem:[%s1 + $0x70] sm:$0xff]
    %v35 = vld [vmem:[%s1 + $0x78] sm:$0xff]
    %37 = vst [vmem:[#allocation1] ss:$9 sm:$0xff] %v19
    %v38 = vld [vmem:[#allocation1] sm:$0xff]
    %v39 = vld [vmem:[#allocation1 + $0x9] sm:$0xff]
    %v40 = vld [vmem:[#allocation1 + $0x12] sm:$0xff]
    %v41 = vld [vmem:[#allocation1 + $0x1b] sm:$0xff]
    %v42 = vld [vmem:[#allocation1 + $0x24] sm:$0xff]
    %v43 = vld [vmem:[#allocation1 + $0x2d] sm:$0xff]
    %v44 = vld [vmem:[#allocation1 + $0x36] sm:$0xff]
    %v45 = vld [vmem:[#allocation1 + $0x3f] sm:$0xff]
    %v70 = vunpack.c.l.b16 %v20
    %v71 = vunpack.c.h.b16 %v20
    %v72 = vunpack.c.l.b16 %v21
    %v73 = vunpack.c.h.b16 %v21
    %v74 = vunpack.c.l.b16 %v22
    %v75 = vunpack.c.h.b16 %v22
    %v76 = vunpack.c.l.b16 %v23
    %v77 = vunpack.c.h.b16 %v23
    %v78 = vunpack.c.l.b16 %v24
    %v79 = vunpack.c.h.b16 %v24
    %v80 = vunpack.c.l.b16 %v25
    %v81 = vunpack.c.h.b16 %v25
    %v82 = vunpack.c.l.b16 %v26
    %v83 = vunpack.c.h.b16 %v26
    %v84 = vunpack.c.l.b16 %v27
    %v85 = vunpack.c.h.b16 %v27
    %v86 = vunpack.c.l.b16 %v28
    %v87 = vunpack.c.h.b16 %v28
    %v88 = vunpack.c.l.b16 %v29
    %v89 = vunpack.c.h.b16 %v29
    %v90 = vunpack.c.l.b16 %v30
    %v91 = vunpack.c.h.b16 %v30
    %v92 = vunpack.c.l.b16 %v31
    %v93 = vunpack.c.h.b16 %v31
    %v94 = vunpack.c.l.b16 %v32
    %v95 = vunpack.c.h.b16 %v32
    %v96 = vunpack.c.l.b16 %v33
    %v97 = vunpack.c.h.b16 %v33
    %v98 = vunpack.c.l.b16 %v34
    %v99 = vunpack.c.h.b16 %v34
    %v100 = vunpack.c.l.b16 %v35
    %v101 = vunpack.c.h.b16 %v35
    %v102 = vpack.c.b16 %v78, %v70
    %v103 = vpack.c.b16 %v79, %v71
    %v104 = vpack.c.b16 %v80, %v72
    %v105 = vpack.c.b16 %v81, %v73
    %v106 = vpack.c.b16 %v82, %v74
    %v107 = vpack.c.b16 %v83, %v75
    %v108 = vpack.c.b16 %v84, %v76
    %v109 = vpack.c.b16 %v85, %v77
    %v110 = vpack.c.b16 %v94, %v86
    %v111 = vpack.c.b16 %v95, %v87
    %v112 = vpack.c.b16 %v96, %v88
    %v113 = vpack.c.b16 %v97, %v89
    %v114 = vpack.c.b16 %v98, %v90
    %v115 = vpack.c.b16 %v99, %v91
    %v116 = vpack.c.b16 %v100, %v92
    %v117 = vpack.c.b16 %v101, %v93
    %134 = vmatpush.bf16.xpose.msra.mxu0 0
    %135 = vmatpush.bf16.xpose.msra.mxu0 0
    %136 = vmatpush.bf16.xpose.msra.mxu0 0
    %137 = vmatpush.bf16.xpose.msra.mxu0 0
    %138 = vmatpush.bf16.xpose.msra.mxu0 0
    %139 = vmatpush.bf16.xpose.msra.mxu0 0
    %140 = vmatpush.bf16.xpose.msra.mxu0 %v110
    %141 = vmatpush.bf16.xpose.msra.mxu0 %v102
    %142 = vmatmul.bf16.gmra.mxu0 %v38
    %v143 = vpop.f32.mrf.mxu0
    %v144 = vadd.f32 0.0, %v143
    %v145 = vpop.f32.mrf.mxu0
    %146 = vdwg.mxu0
    %147 = vmatpush.bf16.xpose.msra.mxu0 0
    %148 = vmatpush.bf16.xpose.msra.mxu0 0
    %149 = vmatpush.bf16.xpose.msra.mxu0 0
    %150 = vmatpush.bf16.xpose.msra.mxu0 0
    %151 = vmatpush.bf16.xpose.msra.mxu0 0
    %152 = vmatpush.bf16.xpose.msra.mxu0 0
    %153 = vmatpush.bf16.xpose.msra.mxu0 %v111
    %154 = vmatpush.bf16.xpose.msra.mxu0 %v103
    %155 = vmatmul.bf16.gmra.mxu0 %v39
    %v156 = vpop.f32.mrf.mxu0
    %v157 = vadd.f32 %v144, %v156
    %v158 = vpop.f32.mrf.mxu0
    %159 = vdwg.mxu0
    %160 = vmatpush.bf16.xpose.msra.mxu0 0
    %161 = vmatpush.bf16.xpose.msra.mxu0 0
    %162 = vmatpush.bf16.xpose.msra.mxu0 0
    %163 = vmatpush.bf16.xpose.msra.mxu0 0
    %164 = vmatpush.bf16.xpose.msra.mxu0 0
    %165 = vmatpush.bf16.xpose.msra.mxu0 0
    %166 = vmatpush.bf16.xpose.msra.mxu0 %v112
    %167 = vmatpush.bf16.xpose.msra.mxu0 %v104
    %168 = vmatmul.bf16.gmra.mxu0 %v40
    %v169 = vpop.f32.mrf.mxu0
    %v170 = vadd.f32 %v157, %v169
    %v171 = vpop.f32.mrf.mxu0
    %172 = vdwg.mxu0
    %173 = vmatpush.bf16.xpose.msra.mxu0 0
    %174 = vmatpush.bf16.xpose.msra.mxu0 0
    %175 = vmatpush.bf16.xpose.msra.mxu0 0
    %176 = vmatpush.bf16.xpose.msra.mxu0 0
    %177 = vmatpush.bf16.xpose.msra.mxu0 0
    %178 = vmatpush.bf16.xpose.msra.mxu0 0
    %179 = vmatpush.bf16.xpose.msra.mxu0 %v113
    %180 = vmatpush.bf16.xpose.msra.mxu0 %v105
    %181 = vmatmul.bf16.gmra.mxu0 %v41
    %v182 = vpop.f32.mrf.mxu0
    %v183 = vadd.f32 %v170, %v182
    %v184 = vpop.f32.mrf.mxu0
    %185 = vdwg.mxu0
    %186 = vmatpush.bf16.xpose.msra.mxu0 0
    %187 = vmatpush.bf16.xpose.msra.mxu0 0
    %188 = vmatpush.bf16.xpose.msra.mxu0 0
    %189 = vmatpush.bf16.xpose.msra.mxu0 0
    %190 = vmatpush.bf16.xpose.msra.mxu0 0
    %191 = vmatpush.bf16.xpose.msra.mxu0 0
    %192 = vmatpush.bf16.xpose.msra.mxu0 %v114
    %193 = vmatpush.bf16.xpose.msra.mxu0 %v106
    %194 = vmatmul.bf16.gmra.mxu0 %v42
    %v195 = vpop.f32.mrf.mxu0
    %v196 = vadd.f32 %v183, %v195
    %v197 = vpop.f32.mrf.mxu0
    %198 = vdwg.mxu0
    %199 = vmatpush.bf16.xpose.msra.mxu0 0
    %200 = vmatpush.bf16.xpose.msra.mxu0 0
    %201 = vmatpush.bf16.xpose.msra.mxu0 0
    %202 = vmatpush.bf16.xpose.msra.mxu0 0
    %203 = vmatpush.bf16.xpose.msra.mxu0 0
    %204 = vmatpush.bf16.xpose.msra.mxu0 0
    %205 = vmatpush.bf16.xpose.msra.mxu0 %v115
    %206 = vmatpush.bf16.xpose.msra.mxu0 %v107
    %207 = vmatmul.bf16.gmra.mxu0 %v43
    %v208 = vpop.f32.mrf.mxu0
    %v209 = vadd.f32 %v196, %v208
    %v210 = vpop.f32.mrf.mxu0
    %211 = vdwg.mxu0
    %212 = vmatpush.bf16.xpose.msra.mxu0 0
    %213 = vmatpush.bf16.xpose.msra.mxu0 0
    %214 = vmatpush.bf16.xpose.msra.mxu0 0
    %215 = vmatpush.bf16.xpose.msra.mxu0 0
    %216 = vmatpush.bf16.xpose.msra.mxu0 0
    %217 = vmatpush.bf16.xpose.msra.mxu0 0
    %218 = vmatpush.bf16.xpose.msra.mxu0 %v116
    %219 = vmatpush.bf16.xpose.msra.mxu0 %v108
    %220 = vmatmul.bf16.gmra.mxu0 %v44
    %v221 = vpop.f32.mrf.mxu0
    %v222 = vadd.f32 %v209, %v221
    %v223 = vpop.f32.mrf.mxu0
    %224 = vdwg.mxu0
    %225 = vmatpush.bf16.xpose.msra.mxu0 0
    %226 = vmatpush.bf16.xpose.msra.mxu0 0
    %227 = vmatpush.bf16.xpose.msra.mxu0 0
    %228 = vmatpush.bf16.xpose.msra.mxu0 0
    %229 = vmatpush.bf16.xpose.msra.mxu0 0
    %230 = vmatpush.bf16.xpose.msra.mxu0 0
    %231 = vmatpush.bf16.xpose.msra.mxu0 %v117
    %232 = vmatpush.bf16.xpose.msra.mxu0 %v109
    %233 = vmatmul.bf16.gmra.mxu0 %v45
    %v234 = vpop.f32.mrf.mxu0
    %v235 = vadd.f32 %v222, %v234
    %v236 = vpop.f32.mrf.mxu0
    %237 = vdwg.mxu0
    %v238 = vld [vmem:[%s2] sm:$0x3]
    %v239 = vld [vmem:[%s3] sm:$0xff]
    %v240 = vld [vmem:[%s3 + $0x8] sm:$0xff]
    %vm241 = vcmask 130048
    %v243 = vsel %vm241, %v238, 0
    %245 = vmatpush.msra.mxu0 0.0
    %246 = vmatpush.msra.mxu0 0.0
    %247 = vmatpush.msra.mxu0 0.0
    %248 = vmatpush.msra.mxu0 0.0
    %249 = vmatpush.msra.mxu0 0.0
    %250 = vmatpush.msra.mxu0 0.0
    %251 = vmatpush.msra.mxu0 0.0
    %252 = vmatpush.msra.mxu0 0.0
    %253 = vmatpush.msra.mxu0 0.0
    %254 = vmatpush.msra.mxu0 0.0
    %255 = vmatpush.msra.mxu0 0.0
    %256 = vmatpush.msra.mxu0 0.0
    %257 = vmatpush.msra.mxu0 0.0
    %258 = vmatpush.msra.mxu0 0.0
    %259 = vmatpush.msra.mxu0 %v240
    %260 = vmatpush.msra.mxu0 %v239
    %261 = vmatmul.f32.gmra.mxu0 %v243
    %v262 = vpop.f32.mrf.mxu0
    %v263 = vadd.f32 0.0, %v262
    %264 = vdwg.mxu0
    %v265 = vmul.f32 %v235, %v235
    %vm266 = vcmask 254976
    %v267 = vsel %vm266, %v265, 0.0
    %268 = vadd.xlane.f32.xlu0 %v267
    %v269 = vpop.xlane.xlu0 %268
    %v270 = vrsqrt.pop %v269
    %v271 = vmul.f32 %v270, %v269
    %v272 = vmul.f32 %v271, %v270
    %v273 = vmul.f32 0.5, %v272
    %v274 = vsub.f32 1.5, %v273
    %v275 = vmul.f32 %v270, %v274
    %vm276 = vweird.f32 %v269
    %vm277 = vweird.f32 %v270
    %vm278 = vmor %vm276, %vm277
    %v279 = vsel %vm278, %v270, %v275
    %v280 = vmul.f32 %v235, %v279
    %v281 = vmul.f32 %v263, %v263
    %v282 = vsel %vm266, %v281, 0.0
    %283 = vadd.xlane.f32.xlu0 %v282
    %v284 = vpop.xlane.xlu0 %283
    %v285 = vrsqrt.pop %v284
    %v286 = vmul.f32 %v285, %v284
    %v287 = vmul.f32 %v286, %v285
    %v288 = vmul.f32 0.5, %v287
    %v289 = vsub.f32 1.5, %v288
    %v290 = vmul.f32 %v285, %v289
    %vm291 = vweird.f32 %v284
    %vm292 = vweird.f32 %v285
    %vm293 = vmor %vm291, %vm292
    %v294 = vsel %vm293, %v285, %v290
    %v295 = vmul.f32 %v263, %v294
    %v297 = vrot.slane %v280, 1
    %v298 = vperm.slane %v280, 0
    %v299 = vperm.slane %v297, 0
    %v302 = vmul.f32 %v298, %v295
    %v303 = vmul.f32 %v299, %v295
    %v304 = vsel %vm266, %v302, 0.0
    %305 = vadd.xlane.f32.xlu0 %v304
    %v306 = vpop.xlane.xlu0 %305
    %v307 = vsel %vm266, %v303, 0.0
    %308 = vadd.xlane.f32.xlu0 %v307
    %v309 = vpop.xlane.xlu0 %308
    %v310 = vmul.f32 %v306, -1.0
    %v311 = vmul.f32 %v309, -1.0
    %v312 = vadd.f32 %v310, 1.0
    %v313 = vadd.f32 %v311, 1.0
    %v316 = vlaneseq
    %v317 = vand.u32 %v316, 127
    %v318 = vperm.slane %v312, %v317
    %v319 = vperm.slane %v313, %v317
    %vm320 = vcmask 1041409
    %v321 = vsel %vm320, %v319, %v318
    %vm323 = vcmask 9216
    %324 = vst.msk [vmem:[#allocation2] sm:$0x3] %vm323, %v321
    // Predicated region
    $region18: #{clip_loss_forward.1} parent=1 // pred_check
      _
    $region19: #{clip_loss_forward.1} parent=1 // pred_check_branch
      %326 = sbr.rel (0) target = $region21
    $region20: #{clip_loss_forward.1} parent=1 // pred_region
      %328 = vsyncadd [#allocation3], 0
      %s330 = sshll.u32 [#allocation2], 4
      %s331 = int_to_ptr.vmem [resolvable:$true] %s330
      %s332 = sshll.u32 %s4, 4
      %s333 = int_to_ptr.hbm [resolvable:$true] %s332
      %335 = dma.vmem_to_hbm [thread:$0]  %s331, 32, %s333, [#allocation3]
    $region21: #{clip_loss_forward.1} parent=1 // pred_fallthru
      _
    // Predicated region
    $region22: #{clip_loss_forward.1} parent=1 // pred_check
      _
    $region23: #{clip_loss_forward.1} parent=1 // pred_check_branch
      %337 = sbr.rel (0) target = $region25
    $region24: #{clip_loss_forward.1} parent=1 // pred_region
      %339 = dma.done [#allocation3], 32
    $region25: #{clip_loss_forward.1} parent=1 // pred_fallthru
      _
    %340 = vsyncpa [#allocation3], 1

</llo_original>
